<compile_context>
chip_gen: v6e
topology: v6e:2x2x1
jax: 0.10.0
libtpu: 0.0.40
codegen_flags: <defaults>
</compile_context>

<pallas_src>
import functools

import jax
import jax.numpy as jnp
from jax.experimental import pallas as pl
from jax.experimental.pallas import tpu as pltpu

_LANE = 128        # lane width  -> feature-axis padding
_SUBLANE = 8       # f32 sublane -> batch-axis padding
_MIB = 1024 * 1024
# Budget for VMEM-resident (single-buffered) weights; keeps headroom on the
# v7x 64 MiB/TensorCore VMEM.
_RESIDENT_WEIGHT_LIMIT = 48 * _MIB


def _round_up(x, m):
    return ((x + m - 1) // m) * m


# ----------------------------- Pallas kernel ------------------------------- #
def _fused_mlp_kernel(x_ref, *refs, n_layers: int):
    """Fused MLP on one batch tile.

    refs = (w0, b0, w1, b1, ..., w_{L-1}, b_{L-1}, o_ref)
    Weights are bf16 full-array VMEM residents; biases are f32.  Feature axes
    are pre-padded to multiples of 128 and the batch tile to a multiple of 8,
    so all matmuls / stores are full-vreg (unmasked).
    """
    o_ref = refs[-1]
    wb = refs[:-1]

    h = x_ref[...]                                    # (bt, n_in_pad), f32
    for layer in range(n_layers):                     # static, unrolled
        w = wb[2 * layer][...]                        # (fan_in_pad, fan_out_pad) bf16
        b = wb[2 * layer + 1][...]                    # (1, fan_out_pad) f32
        # bf16 MXU operands, f32 accumulation; bias add stays f32 (v5e-safe).
        y = jnp.dot(h.astype(jnp.bfloat16), w,
                    preferred_element_type=jnp.float32) + b
        if layer < n_layers - 1:
            # SiLU(y) = y * sigmoid(y); sigmoid via a single tanh EUP op.
            y = y * (0.5 * (1.0 + jnp.tanh(0.5 * y)))
        h = y
    o_ref[...] = h.astype(o_ref.dtype)


# ------------------------------ Wrapper ------------------------------------ #
def pad_ann_params(params, weight_dtype=jnp.bfloat16):
    """Zero-pad every (W, b) to lane-dense shapes; weights -> bf16, biases f32.

    Done ONCE, outside the per-step hot path.
    """
    padded = []
    for w, b in params:
        fi, fo = w.shape
        pi, po = _round_up(fi, _LANE), _round_up(fo, _LANE)
        w_p = (jnp.zeros((pi, po), weight_dtype)
               .at[:fi, :fo].set(w.astype(weight_dtype)))
        b_p = (jnp.zeros((1, po), jnp.float32)
               .at[:, :fo].set(b.reshape(1, -1).astype(jnp.float32)))
        padded.append((w_p, b_p))
    return padded


def ann_forward(padded_params, x, *, n_out: int, batch_tile: int = 512):
    """Forward pass matching ANN.forward with activation='silu'.

    `padded_params` come from pad_ann_params; `x` is the unpadded
    (batch, n_in) f32 input.  Returns (batch, n_out) f32.
    """
    batch, n_in = x.shape
    n_layers = len(padded_params)
    n_in_pad = padded_params[0][0].shape[0]
    n_out_pad = padded_params[-1][0].shape[1]

    # ---- batch tiling -------------------------------------------------------
    batch_r = _round_up(batch, _SUBLANE)
    if batch_r <= _SUBLANE:
        bt = _SUBLANE                                   # tiny inference path
    else:
        # >= 2 grid steps so both v7x TensorCores get work ("parallel" axis),
        # capped at batch_tile per step.
        bt = min(_round_up(batch_tile, _SUBLANE),
                 _round_up((batch_r + 1) // 2, _SUBLANE))
    batch_pad = _round_up(batch_r, bt)
    grid = (batch_pad // bt,)

    # ---- input padding (skipped when already aligned; for repeated inference
    # callers can pre-pad x once and pass it directly) -------------------------
    if (batch_pad, n_in_pad) == (batch, n_in):
        x_p = x
    else:
        x_p = jnp.zeros((batch_pad, n_in_pad), x.dtype).at[:batch, :n_in].set(x)

    # ---- VMEM budget / feasibility guard ------------------------------------
    weight_bytes = sum(int(w.size) * w.dtype.itemsize
                       + int(b.size) * b.dtype.itemsize
                       for w, b in padded_params)
    if weight_bytes > _RESIDENT_WEIGHT_LIMIT:
        # TODO(synk): stream K/N weight tiles of the large layers via an extra
        # "arbitrary" grid axis instead of keeping whole matrices VMEM-resident.
        raise ValueError(
            f"Padded weights ({weight_bytes / _MIB:.1f} MiB) exceed the "
            f"resident-VMEM budget ({_RESIDENT_WEIGHT_LIMIT / _MIB:.0f} MiB); "
            "a weight-streaming path is required for this size.")

    max_feat = max([n_in_pad] + [int(w.shape[1]) for w, _ in padded_params])
    io_bytes = 2 * (bt * n_in_pad * 4) + 2 * (bt * n_out_pad * 4)  # dbl-buffered tiles
    act_bytes = 4 * bt * max_feat * 4                              # live activations/casts
    vmem_limit = int(1.5 * (weight_bytes + io_bytes + act_bytes))
    vmem_limit = min(max(vmem_limit, 16 * _MIB), 96 * _MIB)

    # ---- specs ---------------------------------------------------------------
    x_spec = pl.BlockSpec((bt, n_in_pad), lambda i: (i, 0))
    out_spec = pl.BlockSpec((bt, n_out_pad), lambda i: (i, 0))
    # Weights/biases: untiled, single-buffered VMEM residents (no pipelining).
    wb_specs = []
    for _w, _b in padded_params:
        wb_specs.append(pl.BlockSpec(memory_space=pltpu.MemorySpace.VMEM))
        wb_specs.append(pl.BlockSpec(memory_space=pltpu.MemorySpace.VMEM))

    # ---- advisory cost estimate ----------------------------------------------
    flops = 2 * batch_pad * sum(int(w.shape[0]) * int(w.shape[1])
                                for w, _ in padded_params)
    transcendentals = batch_pad * sum(int(w.shape[1])
                                      for w, _ in padded_params[:-1])
    bytes_accessed = (weight_bytes
                      + 4 * batch_pad * n_in_pad
                      + 4 * batch_pad * n_out_pad)

    flat_wb = [a for wb in padded_params for a in wb]
    kernel = functools.partial(_fused_mlp_kernel, n_layers=n_layers)

    y_pad = pl.pallas_call(
        kernel,
        out_shape=jax.ShapeDtypeStruct((batch_pad, n_out_pad), x.dtype),
        grid=grid,
        in_specs=[x_spec] + wb_specs,
        out_specs=out_spec,
        compiler_params=pltpu.CompilerParams(
            dimension_semantics=("parallel",),
            vmem_limit_bytes=vmem_limit),
        cost_estimate=pl.CostEstimate(
            flops=flops,
            transcendentals=transcendentals,
            bytes_accessed=bytes_accessed),
    )(x_p, *flat_wb)

    if (batch_pad, n_out_pad) == (batch, n_out):
        return y_pad
    return y_pad[:batch, :n_out]


# ------------------------------ Init / reference ---------------------------- #
def init_ann_params(key, n_in, n_out, n_nodes, n_layers, dtype=jnp.float32):
    """PyTorch-style init: U(-1/sqrt(fan_in), 1/sqrt(fan_in)).

    Weights stored as (fan_in, fan_out) (PyTorch W.T) so the kernel does x @ W.
    Layer list: in->h, (nLayers-1) x h->h, h->out.
    """
    dims = [(n_in, n_nodes)] + [(n_nodes, n_nodes)] * (n_layers - 1) + [(n_nodes, n_out)]
    params = []
    for fan_in, fan_out in dims:
        key, kw, kb = jax.random.split(key, 3)
        bound = 1.0 / jnp.sqrt(jnp.asarray(fan_in, jnp.float32))
        w = jax.random.uniform(kw, (fan_in, fan_out), dtype, -bound, bound)
        b = jax.random.uniform(kb, (1, fan_out), dtype, -bound, bound)
        params.append((w, b))
    return params


def ann_forward_ref(params, x, matmul_dtype=jnp.float32):
    """Pure-JAX reference; matmul_dtype=bfloat16 mimics the kernel's MXU path."""
    *hidden, last = params
    h = x
    for w, b in hidden:
        z = jnp.dot(h.astype(matmul_dtype), w.astype(matmul_dtype),
                    preferred_element_type=jnp.float32) + b
        h = jax.nn.silu(z)
    w, b = last
    return jnp.dot(h.astype(matmul_dtype), w.astype(matmul_dtype),
                   preferred_element_type=jnp.float32) + b


if __name__ == "__main__":
    # ANN(n_in=16, n_out=4, nNodes=32, nLayers=3), batch=2.
    n_in, n_out, n_nodes, n_layers = 16, 4, 32, 3
    batch = 2

    key = jax.random.PRNGKey(0)
    key, kx = jax.random.split(key)
    x = jax.random.normal(kx, (batch, n_in), jnp.float32)

    params = init_ann_params(key, n_in, n_out, n_nodes, n_layers)
    padded_params = pad_ann_params(params)      # one-time bf16 lane-dense padding

    fwd = jax.jit(functools.partial(ann_forward, n_out=n_out))
    y = fwd(padded_params, x)
    y = jax.block_until_ready(y)
    assert y.shape == (batch, n_out), y.shape

    # Tight check vs a reference that uses the same bf16-operand / f32-accumulate
    # matmul path as the kernel.
    y_ref_bf16 = ann_forward_ref(params, x, matmul_dtype=jnp.bfloat16)
    assert jnp.allclose(y, y_ref_bf16, atol=1e-3, rtol=1e-3), (y, y_ref_bf16)

    # Looser check vs the full-f32 PyTorch-equivalent forward (bf16 weight
    # quantization is the only approximation).
    y_ref_f32 = ann_forward_ref(params, x, matmul_dtype=jnp.float32)
    assert jnp.allclose(y, y_ref_f32, atol=3e-2, rtol=3e-2), (y, y_ref_f32)

    print("KERNEL_OK")
</pallas_src>

<mosaic_0001>
module attributes {stable_mosaic.version = 11 : i64} {
  func.func @_fused_mlp_kernel(%arg0: i32, %arg1: memref<8x128xf32, #tpu.memory_space<vmem>>, %arg2: memref<128x128xbf16, #tpu.memory_space<vmem>>, %arg3: memref<1x128xf32, #tpu.memory_space<vmem>>, %arg4: memref<128x128xbf16, #tpu.memory_space<vmem>>, %arg5: memref<1x128xf32, #tpu.memory_space<vmem>>, %arg6: memref<128x128xbf16, #tpu.memory_space<vmem>>, %arg7: memref<1x128xf32, #tpu.memory_space<vmem>>, %arg8: memref<128x128xbf16, #tpu.memory_space<vmem>>, %arg9: memref<1x128xf32, #tpu.memory_space<vmem>>, %arg10: memref<8x128xf32, #tpu.memory_space<vmem>>) attributes {dimension_semantics = [#tpu.dimension_semantics<parallel>], iteration_bounds = array<i64: 1>, scalar_prefetch = 0 : i64, scratch_operands = 0 : i64, tpu.core_type = #tpu.core_type<tc>, window_params = [{transform_indices = @transform_0, window_bounds = array<i64: 8, 128>}, {pipeline_mode = #tpu.pipeline_mode<synchronous>, transform_indices = @transform_1, window_bounds = array<i64: 128, 128>}, {pipeline_mode = #tpu.pipeline_mode<synchronous>, transform_indices = @transform_2, window_bounds = array<i64: 1, 128>}, {pipeline_mode = #tpu.pipeline_mode<synchronous>, transform_indices = @transform_3, window_bounds = array<i64: 128, 128>}, {pipeline_mode = #tpu.pipeline_mode<synchronous>, transform_indices = @transform_4, window_bounds = array<i64: 1, 128>}, {pipeline_mode = #tpu.pipeline_mode<synchronous>, transform_indices = @transform_5, window_bounds = array<i64: 128, 128>}, {pipeline_mode = #tpu.pipeline_mode<synchronous>, transform_indices = @transform_6, window_bounds = array<i64: 1, 128>}, {pipeline_mode = #tpu.pipeline_mode<synchronous>, transform_indices = @transform_7, window_bounds = array<i64: 128, 128>}, {pipeline_mode = #tpu.pipeline_mode<synchronous>, transform_indices = @transform_8, window_bounds = array<i64: 1, 128>}, {transform_indices = @transform_9, window_bounds = array<i64: 8, 128>}]} {
    %c0 = arith.constant 0 : index
    %c0_0 = arith.constant 0 : index
    %0 = vector.load %arg1[%c0, %c0_0] : memref<8x128xf32, #tpu.memory_space<vmem>>, vector<8x128xf32>
    %c0_1 = arith.constant 0 : index
    %c0_2 = arith.constant 0 : index
    %1 = vector.load %arg2[%c0_1, %c0_2] : memref<128x128xbf16, #tpu.memory_space<vmem>>, vector<128x128xbf16>
    %c0_3 = arith.constant 0 : index
    %c0_4 = arith.constant 0 : index
    %2 = vector.load %arg3[%c0_3, %c0_4] : memref<1x128xf32, #tpu.memory_space<vmem>>, vector<1x128xf32>
    %3 = arith.truncf %0 : vector<8x128xf32> to vector<8x128xbf16>
    %cst = arith.constant dense<0.000000e+00> : vector<8x128xf32>
    %4 = tpu.matmul %3, %1, %cst {dimension_numbers = #tpu.dot_dimension_numbers<[1], [0], [0], [1], [0, 0, 1, 1], [], []>} : vector<8x128xbf16>, vector<128x128xbf16>, vector<8x128xf32> -> vector<8x128xf32>
    %5 = vector.broadcast %2 : vector<1x128xf32> to vector<8x128xf32>
    %6 = arith.addf %4, %5 : vector<8x128xf32>
    %cst_5 = arith.constant 5.000000e-01 : f32
    %7 = vector.broadcast %cst_5 : f32 to vector<8x128xf32>
    %8 = arith.mulf %7, %6 : vector<8x128xf32>
    %9 = math.tanh %8 : vector<8x128xf32>
    %cst_6 = arith.constant 1.000000e+00 : f32
    %10 = vector.broadcast %cst_6 : f32 to vector<8x128xf32>
    %11 = arith.addf %10, %9 : vector<8x128xf32>
    %cst_7 = arith.constant 5.000000e-01 : f32
    %12 = vector.broadcast %cst_7 : f32 to vector<8x128xf32>
    %13 = arith.mulf %12, %11 : vector<8x128xf32>
    %14 = arith.mulf %6, %13 : vector<8x128xf32>
    %c0_8 = arith.constant 0 : index
    %c0_9 = arith.constant 0 : index
    %15 = vector.load %arg4[%c0_8, %c0_9] : memref<128x128xbf16, #tpu.memory_space<vmem>>, vector<128x128xbf16>
    %c0_10 = arith.constant 0 : index
    %c0_11 = arith.constant 0 : index
    %16 = vector.load %arg5[%c0_10, %c0_11] : memref<1x128xf32, #tpu.memory_space<vmem>>, vector<1x128xf32>
    %17 = arith.truncf %14 : vector<8x128xf32> to vector<8x128xbf16>
    %cst_12 = arith.constant dense<0.000000e+00> : vector<8x128xf32>
    %18 = tpu.matmul %17, %15, %cst_12 {dimension_numbers = #tpu.dot_dimension_numbers<[1], [0], [0], [1], [0, 0, 1, 1], [], []>} : vector<8x128xbf16>, vector<128x128xbf16>, vector<8x128xf32> -> vector<8x128xf32>
    %19 = vector.broadcast %16 : vector<1x128xf32> to vector<8x128xf32>
    %20 = arith.addf %18, %19 : vector<8x128xf32>
    %cst_13 = arith.constant 5.000000e-01 : f32
    %21 = vector.broadcast %cst_13 : f32 to vector<8x128xf32>
    %22 = arith.mulf %21, %20 : vector<8x128xf32>
    %23 = math.tanh %22 : vector<8x128xf32>
    %cst_14 = arith.constant 1.000000e+00 : f32
    %24 = vector.broadcast %cst_14 : f32 to vector<8x128xf32>
    %25 = arith.addf %24, %23 : vector<8x128xf32>
    %cst_15 = arith.constant 5.000000e-01 : f32
    %26 = vector.broadcast %cst_15 : f32 to vector<8x128xf32>
    %27 = arith.mulf %26, %25 : vector<8x128xf32>
    %28 = arith.mulf %20, %27 : vector<8x128xf32>
    %c0_16 = arith.constant 0 : index
    %c0_17 = arith.constant 0 : index
    %29 = vector.load %arg6[%c0_16, %c0_17] : memref<128x128xbf16, #tpu.memory_space<vmem>>, vector<128x128xbf16>
    %c0_18 = arith.constant 0 : index
    %c0_19 = arith.constant 0 : index
    %30 = vector.load %arg7[%c0_18, %c0_19] : memref<1x128xf32, #tpu.memory_space<vmem>>, vector<1x128xf32>
    %31 = arith.truncf %28 : vector<8x128xf32> to vector<8x128xbf16>
    %cst_20 = arith.constant dense<0.000000e+00> : vector<8x128xf32>
    %32 = tpu.matmul %31, %29, %cst_20 {dimension_numbers = #tpu.dot_dimension_numbers<[1], [0], [0], [1], [0, 0, 1, 1], [], []>} : vector<8x128xbf16>, vector<128x128xbf16>, vector<8x128xf32> -> vector<8x128xf32>
    %33 = vector.broadcast %30 : vector<1x128xf32> to vector<8x128xf32>
    %34 = arith.addf %32, %33 : vector<8x128xf32>
    %cst_21 = arith.constant 5.000000e-01 : f32
    %35 = vector.broadcast %cst_21 : f32 to vector<8x128xf32>
    %36 = arith.mulf %35, %34 : vector<8x128xf32>
    %37 = math.tanh %36 : vector<8x128xf32>
    %cst_22 = arith.constant 1.000000e+00 : f32
    %38 = vector.broadcast %cst_22 : f32 to vector<8x128xf32>
    %39 = arith.addf %38, %37 : vector<8x128xf32>
    %cst_23 = arith.constant 5.000000e-01 : f32
    %40 = vector.broadcast %cst_23 : f32 to vector<8x128xf32>
    %41 = arith.mulf %40, %39 : vector<8x128xf32>
    %42 = arith.mulf %34, %41 : vector<8x128xf32>
    %c0_24 = arith.constant 0 : index
    %c0_25 = arith.constant 0 : index
    %43 = vector.load %arg8[%c0_24, %c0_25] : memref<128x128xbf16, #tpu.memory_space<vmem>>, vector<128x128xbf16>
    %c0_26 = arith.constant 0 : index
    %c0_27 = arith.constant 0 : index
    %44 = vector.load %arg9[%c0_26, %c0_27] : memref<1x128xf32, #tpu.memory_space<vmem>>, vector<1x128xf32>
    %45 = arith.truncf %42 : vector<8x128xf32> to vector<8x128xbf16>
    %cst_28 = arith.constant dense<0.000000e+00> : vector<8x128xf32>
    %46 = tpu.matmul %45, %43, %cst_28 {dimension_numbers = #tpu.dot_dimension_numbers<[1], [0], [0], [1], [0, 0, 1, 1], [], []>} : vector<8x128xbf16>, vector<128x128xbf16>, vector<8x128xf32> -> vector<8x128xf32>
    %47 = vector.broadcast %44 : vector<1x128xf32> to vector<8x128xf32>
    %48 = arith.addf %46, %47 : vector<8x128xf32>
    %c0_29 = arith.constant 0 : index
    %c0_30 = arith.constant 0 : index
    %49 = vector.load %arg10[%c0_29, %c0_30] : memref<8x128xf32, #tpu.memory_space<vmem>>, vector<8x128xf32>
    tpu.vector_store %arg10[%c0_29, %c0_30], %48 {strides = array<i32>} : memref<8x128xf32, #tpu.memory_space<vmem>>, vector<8x128xf32>,
    return
  }
  func.func @transform_0(%arg0: i32) -> (i32, i32) {
    %c0_i32 = arith.constant 0 : i32
    %c0_i32_0 = arith.constant 0 : i32
    return %arg0, %c0_i32 : i32, i32
  }
  func.func @transform_1(%arg0: i32) -> (i32, i32) {
    %c0_i32 = arith.constant 0 : i32
    %c0_i32_0 = arith.constant 0 : i32
    %c0_i32_1 = arith.constant 0 : i32
    return %c0_i32, %c0_i32_0 : i32, i32
  }
  func.func @transform_2(%arg0: i32) -> (i32, i32) {
    %c0_i32 = arith.constant 0 : i32
    %c0_i32_0 = arith.constant 0 : i32
    %c0_i32_1 = arith.constant 0 : i32
    return %c0_i32, %c0_i32_0 : i32, i32
  }
  func.func @transform_3(%arg0: i32) -> (i32, i32) {
    %c0_i32 = arith.constant 0 : i32
    %c0_i32_0 = arith.constant 0 : i32
    %c0_i32_1 = arith.constant 0 : i32
    return %c0_i32, %c0_i32_0 : i32, i32
  }
  func.func @transform_4(%arg0: i32) -> (i32, i32) {
    %c0_i32 = arith.constant 0 : i32
    %c0_i32_0 = arith.constant 0 : i32
    %c0_i32_1 = arith.constant 0 : i32
    return %c0_i32, %c0_i32_0 : i32, i32
  }
  func.func @transform_5(%arg0: i32) -> (i32, i32) {
    %c0_i32 = arith.constant 0 : i32
    %c0_i32_0 = arith.constant 0 : i32
    %c0_i32_1 = arith.constant 0 : i32
    return %c0_i32, %c0_i32_0 : i32, i32
  }
  func.func @transform_6(%arg0: i32) -> (i32, i32) {
    %c0_i32 = arith.constant 0 : i32
    %c0_i32_0 = arith.constant 0 : i32
    %c0_i32_1 = arith.constant 0 : i32
    return %c0_i32, %c0_i32_0 : i32, i32
  }
  func.func @transform_7(%arg0: i32) -> (i32, i32) {
    %c0_i32 = arith.constant 0 : i32
    %c0_i32_0 = arith.constant 0 : i32
    %c0_i32_1 = arith.constant 0 : i32
    return %c0_i32, %c0_i32_0 : i32, i32
  }
  func.func @transform_8(%arg0: i32) -> (i32, i32) {
    %c0_i32 = arith.constant 0 : i32
    %c0_i32_0 = arith.constant 0 : i32
    %c0_i32_1 = arith.constant 0 : i32
    return %c0_i32, %c0_i32_0 : i32, i32
  }
  func.func @transform_9(%arg0: i32) -> (i32, i32) {
    %c0_i32 = arith.constant 0 : i32
    %c0_i32_0 = arith.constant 0 : i32
    return %arg0, %c0_i32 : i32, i32
  }
}

</mosaic_0001>

<llo_original>
// kernel: ann_forward.1
$region0: #{ann_forward.1}
  #allocation0 [shape = 'u32[]', space=smem, size = 0x4, offset = 0x4, fixed_abs, tag = 'smem constant byte address 0x4 - core index']
  #allocation1 [shape = 'u32[144,128]{1,0:T(1,128)}', space=vmem, size = 0x12000, scoped, tag = 'internal scratch']
  %s0 = inlined_call_operand.vmem [shape: f32[8,128], index: 0, kind: input, shape index: {}]
  %s1 = inlined_call_operand.hbm [shape: bf16[128,128], index: 1, kind: input, shape index: {}]
  %s2 = inlined_call_operand.vmem [shape: f32[1,128], index: 2, kind: input, shape index: {}]
  %s3 = inlined_call_operand.hbm [shape: bf16[128,128], index: 3, kind: input, shape index: {}]
  %s4 = inlined_call_operand.vmem [shape: f32[1,128], index: 4, kind: input, shape index: {}]
  %s5 = inlined_call_operand.hbm [shape: bf16[128,128], index: 5, kind: input, shape index: {}]
  %s6 = inlined_call_operand.vmem [shape: f32[1,128], index: 6, kind: input, shape index: {}]
  %s7 = inlined_call_operand.hbm [shape: bf16[128,128], index: 7, kind: input, shape index: {}]
  %s8 = inlined_call_operand.vmem [shape: f32[1,128], index: 8, kind: input, shape index: {}]
  %s9 = inlined_call_operand.vmem [shape: f32[8,128], index: 9, kind: output, shape index: {}]
  %s10 = sld [smem:[#allocation0]]
  $region62: #{ann_forward.1} parent=0
    _
  %s12 = ssub.s32 1, %s10
  %s13 = scalar_select 0, %s12, %s10
  $region1: #{ann_forward.1} parent=0
    #allocation2 [shape = 'u8[32768]{0}', space=vmem, size = 0x8000, scoped, tag = 'input window, operand 1, single buffered']
    #allocation3 [shape = 's32[1]{0}', space=sflag, size = 0x4, scoped, tag = 'scoped memory for ann_forward.1']
    #allocation4 [shape = 'u8[32768]{0}', space=vmem, size = 0x8000, scoped, tag = 'input window, operand 3, single buffered']
    #allocation5 [shape = 's32[1]{0}', space=sflag, size = 0x4, scoped, tag = 'scoped memory for ann_forward.1']
    #allocation6 [shape = 'u8[32768]{0}', space=vmem, size = 0x8000, scoped, tag = 'input window, operand 5, single buffered']
    #allocation7 [shape = 'u8[32768]{0}', space=vmem, size = 0x8000, scoped, tag = 'input window, operand 7, single buffered']
    #allocation8 [shape = 's32[1]{0}', space=sflag, size = 0x4, scoped, tag = 'scoped memory for ann_forward.1']
    %14 = vsyncpa [#allocation3], 0
    %15 = vsyncpa [#allocation5], 0
    %16 = vsyncpa [#allocation8], 0
    // Predicated region
    $region2: #{ann_forward.1} parent=1 // pred_check
      _
    $region3: #{ann_forward.1} parent=1 // pred_check_branch
      %18 = sbr.rel (0) target = $region5
    $region4: #{ann_forward.1} parent=1 // pred_region
      _
    $region5: #{ann_forward.1} parent=1 // pred_fallthru
      _
    // Predicated region
    $region6: #{ann_forward.1} parent=1 // pred_check
      _
    $region7: #{ann_forward.1} parent=1 // pred_check_branch
      %20 = sbr.rel (0) target = $region9
    $region8: #{ann_forward.1} parent=1 // pred_region
      %s22 = ssub.s32 1024, 1024
      %23 = vsyncadd [#allocation3], %s22
      %s24 = sshll.u32 [#allocation2], 4
      %s25 = int_to_ptr.vmem [resolvable:$true] %s24
      %30 = dma.hbm_to_vmem [thread:$0]  %s1, 1024, %s25, [#allocation3], 64, 64, 4
    $region9: #{ann_forward.1} parent=1 // pred_fallthru
      _
    // Predicated region
    $region10: #{ann_forward.1} parent=1 // pred_check
      _
    $region11: #{ann_forward.1} parent=1 // pred_check_branch
      %32 = sbr.rel (0) target = $region13
    $region12: #{ann_forward.1} parent=1 // pred_region
      _
    $region13: #{ann_forward.1} parent=1 // pred_fallthru
      _
    // Predicated region
    $region14: #{ann_forward.1} parent=1 // pred_check
      _
    $region15: #{ann_forward.1} parent=1 // pred_check_branch
      %34 = sbr.rel (0) target = $region17
    $region16: #{ann_forward.1} parent=1 // pred_region
      %s36 = ssub.s32 1024, 1024
      %37 = vsyncadd [#allocation5], %s36
      %s38 = sshll.u32 [#allocation4], 4
      %s39 = int_to_ptr.vmem [resolvable:$true] %s38
      %44 = dma.hbm_to_vmem [thread:$0]  %s3, 1024, %s39, [#allocation5], 64, 64, 4
    $region17: #{ann_forward.1} parent=1 // pred_fallthru
      _
    // Predicated region
    $region18: #{ann_forward.1} parent=1 // pred_check
      _
    $region19: #{ann_forward.1} parent=1 // pred_check_branch
      %46 = sbr.rel (0) target = $region21
    $region20: #{ann_forward.1} parent=1 // pred_region
      _
    $region21: #{ann_forward.1} parent=1 // pred_fallthru
      _
    // Predicated region
    $region22: #{ann_forward.1} parent=1 // pred_check
      _
    $region23: #{ann_forward.1} parent=1 // pred_check_branch
      %48 = sbr.rel (0) target = $region25
    $region24: #{ann_forward.1} parent=1 // pred_region
      %s50 = ssub.s32 1024, 1024
      %51 = vsyncadd [#allocation5], %s50
      %s52 = sshll.u32 [#allocation6], 4
      %s53 = int_to_ptr.vmem [resolvable:$true] %s52
      %58 = dma.hbm_to_vmem [thread:$0]  %s5, 1024, %s53, [#allocation5], 64, 64, 4
    $region25: #{ann_forward.1} parent=1 // pred_fallthru
      _
    // Predicated region
    $region26: #{ann_forward.1} parent=1 // pred_check
      _
    $region27: #{ann_forward.1} parent=1 // pred_check_branch
      %60 = sbr.rel (0) target = $region29
    $region28: #{ann_forward.1} parent=1 // pred_region
      _
    $region29: #{ann_forward.1} parent=1 // pred_fallthru
      _
    // Predicated region
    $region30: #{ann_forward.1} parent=1 // pred_check
      _
    $region31: #{ann_forward.1} parent=1 // pred_check_branch
      %62 = sbr.rel (0) target = $region33
    $region32: #{ann_forward.1} parent=1 // pred_region
      %s64 = ssub.s32 1024, 1024
      %65 = vsyncadd [#allocation8], %s64
      %s66 = sshll.u32 [#allocation7], 4
      %s67 = int_to_ptr.vmem [resolvable:$true] %s66
      %72 = dma.hbm_to_vmem [thread:$0]  %s7, 1024, %s67, [#allocation8], 64, 64, 4
    $region33: #{ann_forward.1} parent=1 // pred_fallthru
      _
    // Predicated region
    $region34: #{ann_forward.1} parent=1 // pred_check
      _
    $region35: #{ann_forward.1} parent=1 // pred_check_branch
      %74 = sbr.rel (0) target = $region37
    $region36: #{ann_forward.1} parent=1 // pred_region
      _
    $region37: #{ann_forward.1} parent=1 // pred_fallthru
      _
    // Predicated region
    $region38: #{ann_forward.1} parent=1 // pred_check
      _
    $region39: #{ann_forward.1} parent=1 // pred_check_branch
      %76 = sbr.rel (0) target = $region41
    $region40: #{ann_forward.1} parent=1 // pred_region
      %77 = dma.done [#allocation3], 1024
    $region41: #{ann_forward.1} parent=1 // pred_fallthru
      _
    // Predicated region
    $region42: #{ann_forward.1} parent=1 // pred_check
      _
    $region43: #{ann_forward.1} parent=1 // pred_check_branch
      %79 = sbr.rel (0) target = $region45
    $region44: #{ann_forward.1} parent=1 // pred_region
      %80 = dma.done [#allocation5], 1024
    $region45: #{ann_forward.1} parent=1 // pred_fallthru
      _
    // Predicated region
    $region46: #{ann_forward.1} parent=1 // pred_check
      _
    $region47: #{ann_forward.1} parent=1 // pred_check_branch
      %82 = sbr.rel (0) target = $region49
    $region48: #{ann_forward.1} parent=1 // pred_region
      %83 = dma.done [#allocation5], 1024
    $region49: #{ann_forward.1} parent=1 // pred_fallthru
      _
    // Predicated region
    $region50: #{ann_forward.1} parent=1 // pred_check
      _
    $region51: #{ann_forward.1} parent=1 // pred_check_branch
      %85 = sbr.rel (0) target = $region53
    $region52: #{ann_forward.1} parent=1 // pred_region
      %86 = dma.done [#allocation8], 1024
    $region53: #{ann_forward.1} parent=1 // pred_fallthru
      _
    %v88 = vld [vmem:[%s0] sm:$0xff]
    %v89 = vld [vmem:[#allocation2] sm:$0xf]
    %v90 = vld [vmem:[#allocation2 + $0x4] sm:$0xf]
    %v91 = vld [vmem:[#allocation2 + $0x8] sm:$0xf]
    %v92 = vld [vmem:[#allocation2 + $0xc] sm:$0xf]
    %v93 = vld [vmem:[#allocation2 + $0x10] sm:$0xf]
    %v94 = vld [vmem:[#allocation2 + $0x14] sm:$0xf]
    %v95 = vld [vmem:[#allocation2 + $0x18] sm:$0xf]
    %v96 = vld [vmem:[#allocation2 + $0x1c] sm:$0xf]
    %v97 = vld [vmem:[#allocation2 + $0x20] sm:$0xf]
    %v98 = vld [vmem:[#allocation2 + $0x24] sm:$0xf]
    %v99 = vld [vmem:[#allocation2 + $0x28] sm:$0xf]
    %v100 = vld [vmem:[#allocation2 + $0x2c] sm:$0xf]
    %v101 = vld [vmem:[#allocation2 + $0x30] sm:$0xf]
    %v102 = vld [vmem:[#allocation2 + $0x34] sm:$0xf]
    %v103 = vld [vmem:[#allocation2 + $0x38] sm:$0xf]
    %v104 = vld [vmem:[#allocation2 + $0x3c] sm:$0xf]
    %v105 = vld [vmem:[%s2] sm:$0x1]
    %v106 = vpack.c.bf16 %v88, %v88
    %v108 = vlaneseq
    %v109 = vshrl.u32 %v108, 7
    %v110 = vsub.s32 0, %v109
    %v111 = vrot.slane %v105, %v110
    %v129 = vunpack.c.l.b16 %v89
    %v130 = vunpack.c.l.b16 %v90
    %v131 = vunpack.c.l.b16 %v91
    %v132 = vunpack.c.l.b16 %v92
    %v133 = vunpack.c.l.b16 %v93
    %v134 = vunpack.c.l.b16 %v94
    %v135 = vunpack.c.l.b16 %v95
    %v136 = vunpack.c.l.b16 %v96
    %v137 = vunpack.c.l.b16 %v97
    %v138 = vunpack.c.l.b16 %v98
    %v139 = vunpack.c.l.b16 %v99
    %v140 = vunpack.c.l.b16 %v100
    %v141 = vunpack.c.l.b16 %v101
    %v142 = vunpack.c.l.b16 %v102
    %v143 = vunpack.c.l.b16 %v103
    %v144 = vunpack.c.l.b16 %v104
    %v145 = vpack.c.b16 %v130, %v129
    %v146 = vpack.c.b16 %v132, %v131
    %v147 = vpack.c.b16 %v134, %v133
    %v148 = vpack.c.b16 %v136, %v135
    %v149 = vpack.c.b16 %v138, %v137
    %v150 = vpack.c.b16 %v140, %v139
    %v151 = vpack.c.b16 %v142, %v141
    %v152 = vpack.c.b16 %v144, %v143
    %161 = vmatprep.subr.bf16.mxu0 0
    %162 = vmatpush1.bf16.msra.mxu0 %v152
    %163 = vmatprep.subr.bf16.mxu0 0
    %164 = vmatpush1.bf16.msra.mxu0 %v151
    %165 = vmatprep.subr.bf16.mxu0 0
    %166 = vmatpush1.bf16.msra.mxu0 %v150
    %167 = vmatprep.subr.bf16.mxu0 0
    %168 = vmatpush1.bf16.msra.mxu0 %v149
    %169 = vmatprep.subr.bf16.mxu0 0
    %170 = vmatpush1.bf16.msra.mxu0 %v148
    %171 = vmatprep.subr.bf16.mxu0 0
    %172 = vmatpush1.bf16.msra.mxu0 %v147
    %173 = vmatprep.subr.bf16.mxu0 0
    %174 = vmatpush1.bf16.msra.mxu0 %v146
    %175 = vmatprep.subr.bf16.mxu0 0
    %176 = vmatpush1.bf16.msra.mxu0 %v145
    %177 = vmatprep.subr.bf16.mxu0 0
    %178 = vmatpush2.bf16.msra.mxu0 0
    %179 = vmatprep.subr.bf16.mxu0 0
    %180 = vmatpush2.bf16.msra.mxu0 0
    %181 = vmatprep.subr.bf16.mxu0 0
    %182 = vmatpush2.bf16.msra.mxu0 0
    %183 = vmatprep.subr.bf16.mxu0 0
    %184 = vmatpush2.bf16.msra.mxu0 0
    %185 = vmatprep.subr.bf16.mxu0 0
    %186 = vmatpush2.bf16.msra.mxu0 0
    %187 = vmatprep.subr.bf16.mxu0 0
    %188 = vmatpush2.bf16.msra.mxu0 0
    %189 = vmatprep.subr.bf16.mxu0 0
    %190 = vmatpush2.bf16.msra.mxu0 0
    %191 = vmatprep.subr.bf16.mxu0 0
    %192 = vmatpush2.bf16.msra.mxu0 0
    %193 = vmatprep.mubr.bf16.mxu0 0
    %194 = vmatmul.mubr.bf16.gmra.mxu0 %v106
    %v195 = vpop.f32.mrf.mxu0
    %v196 = vadd.f32 %v111, %v195
    %v197 = vpop.f32.mrf.mxu0
    %v198 = vpop.f32.mrf.mxu0
    %v199 = vpop.f32.mrf.mxu0
    %200 = vdwg.mxu0
    %v201 = vmul.f32 %v196, 0.5
    %v202 = vtanh.pop %v201
    %v203 = vadd.f32 %v202, 1.0
    %v204 = vmul.f32 %v203, 0.5
    %v205 = vmul.f32 %v196, %v204
    %v206 = vld [vmem:[#allocation4] sm:$0xf]
    %v207 = vld [vmem:[#allocation4 + $0x4] sm:$0xf]
    %v208 = vld [vmem:[#allocation4 + $0x8] sm:$0xf]
    %v209 = vld [vmem:[#allocation4 + $0xc] sm:$0xf]
    %v210 = vld [vmem:[#allocation4 + $0x10] sm:$0xf]
    %v211 = vld [vmem:[#allocation4 + $0x14] sm:$0xf]
    %v212 = vld [vmem:[#allocation4 + $0x18] sm:$0xf]
    %v213 = vld [vmem:[#allocation4 + $0x1c] sm:$0xf]
    %v214 = vld [vmem:[#allocation4 + $0x20] sm:$0xf]
    %v215 = vld [vmem:[#allocation4 + $0x24] sm:$0xf]
    %v216 = vld [vmem:[#allocation4 + $0x28] sm:$0xf]
    %v217 = vld [vmem:[#allocation4 + $0x2c] sm:$0xf]
    %v218 = vld [vmem:[#allocation4 + $0x30] sm:$0xf]
    %v219 = vld [vmem:[#allocation4 + $0x34] sm:$0xf]
    %v220 = vld [vmem:[#allocation4 + $0x38] sm:$0xf]
    %v221 = vld [vmem:[#allocation4 + $0x3c] sm:$0xf]
    %v222 = vld [vmem:[%s4] sm:$0x1]
    %v223 = vpack.c.bf16 %v205, %v205
    %v225 = vlaneseq
    %v226 = vshrl.u32 %v225, 7
    %v227 = vsub.s32 0, %v226
    %v228 = vrot.slane %v222, %v227
    %v246 = vunpack.c.l.b16 %v206
    %v247 = vunpack.c.l.b16 %v207
    %v248 = vunpack.c.l.b16 %v208
    %v249 = vunpack.c.l.b16 %v209
    %v250 = vunpack.c.l.b16 %v210
    %v251 = vunpack.c.l.b16 %v211
    %v252 = vunpack.c.l.b16 %v212
    %v253 = vunpack.c.l.b16 %v213
    %v254 = vunpack.c.l.b16 %v214
    %v255 = vunpack.c.l.b16 %v215
    %v256 = vunpack.c.l.b16 %v216
    %v257 = vunpack.c.l.b16 %v217
    %v258 = vunpack.c.l.b16 %v218
    %v259 = vunpack.c.l.b16 %v219
    %v260 = vunpack.c.l.b16 %v220
    %v261 = vunpack.c.l.b16 %v221
    %v262 = vpack.c.b16 %v247, %v246
    %v263 = vpack.c.b16 %v249, %v248
    %v264 = vpack.c.b16 %v251, %v250
    %v265 = vpack.c.b16 %v253, %v252
    %v266 = vpack.c.b16 %v255, %v254
    %v267 = vpack.c.b16 %v257, %v256
    %v268 = vpack.c.b16 %v259, %v258
    %v269 = vpack.c.b16 %v261, %v260
    %278 = vmatprep.subr.bf16.mxu0 0
    %279 = vmatpush1.bf16.msra.mxu0 %v269
    %280 = vmatprep.subr.bf16.mxu0 0
    %281 = vmatpush1.bf16.msra.mxu0 %v268
    %282 = vmatprep.subr.bf16.mxu0 0
    %283 = vmatpush1.bf16.msra.mxu0 %v267
    %284 = vmatprep.subr.bf16.mxu0 0
    %285 = vmatpush1.bf16.msra.mxu0 %v266
    %286 = vmatprep.subr.bf16.mxu0 0
    %287 = vmatpush1.bf16.msra.mxu0 %v265
    %288 = vmatprep.subr.bf16.mxu0 0
    %289 = vmatpush1.bf16.msra.mxu0 %v264
    %290 = vmatprep.subr.bf16.mxu0 0
    %291 = vmatpush1.bf16.msra.mxu0 %v263
    %292 = vmatprep.subr.bf16.mxu0 0
    %293 = vmatpush1.bf16.msra.mxu0 %v262
    %294 = vmatprep.subr.bf16.mxu0 0
    %295 = vmatpush2.bf16.msra.mxu0 0
    %296 = vmatprep.subr.bf16.mxu0 0
    %297 = vmatpush2.bf16.msra.mxu0 0
    %298 = vmatprep.subr.bf16.mxu0 0
    %299 = vmatpush2.bf16.msra.mxu0 0
    %300 = vmatprep.subr.bf16.mxu0 0
    %301 = vmatpush2.bf16.msra.mxu0 0
    %302 = vmatprep.subr.bf16.mxu0 0
    %303 = vmatpush2.bf16.msra.mxu0 0
    %304 = vmatprep.subr.bf16.mxu0 0
    %305 = vmatpush2.bf16.msra.mxu0 0
    %306 = vmatprep.subr.bf16.mxu0 0
    %307 = vmatpush2.bf16.msra.mxu0 0
    %308 = vmatprep.subr.bf16.mxu0 0
    %309 = vmatpush2.bf16.msra.mxu0 0
    %310 = vmatprep.mubr.bf16.mxu0 0
    %311 = vmatmul.mubr.bf16.gmra.mxu0 %v223
    %v312 = vpop.f32.mrf.mxu0
    %v313 = vadd.f32 %v228, %v312
    %v314 = vpop.f32.mrf.mxu0
    %v315 = vpop.f32.mrf.mxu0
    %v316 = vpop.f32.mrf.mxu0
    %317 = vdwg.mxu0
    %v318 = vmul.f32 %v313, 0.5
    %v319 = vtanh.pop %v318
    %v320 = vadd.f32 %v319, 1.0
    %v321 = vmul.f32 %v320, 0.5
    %v322 = vmul.f32 %v313, %v321
    %v323 = vld [vmem:[#allocation6] sm:$0xf]
    %v324 = vld [vmem:[#allocation6 + $0x4] sm:$0xf]
    %v325 = vld [vmem:[#allocation6 + $0x8] sm:$0xf]
    %v326 = vld [vmem:[#allocation6 + $0xc] sm:$0xf]
    %v327 = vld [vmem:[#allocation6 + $0x10] sm:$0xf]
    %v328 = vld [vmem:[#allocation6 + $0x14] sm:$0xf]
    %v329 = vld [vmem:[#allocation6 + $0x18] sm:$0xf]
    %v330 = vld [vmem:[#allocation6 + $0x1c] sm:$0xf]
    %v331 = vld [vmem:[#allocation6 + $0x20] sm:$0xf]
    %v332 = vld [vmem:[#allocation6 + $0x24] sm:$0xf]
    %v333 = vld [vmem:[#allocation6 + $0x28] sm:$0xf]
    %v334 = vld [vmem:[#allocation6 + $0x2c] sm:$0xf]
    %v335 = vld [vmem:[#allocation6 + $0x30] sm:$0xf]
    %v336 = vld [vmem:[#allocation6 + $0x34] sm:$0xf]
    %v337 = vld [vmem:[#allocation6 + $0x38] sm:$0xf]
    %v338 = vld [vmem:[#allocation6 + $0x3c] sm:$0xf]
    %v339 = vld [vmem:[%s6] sm:$0x1]
    %v340 = vpack.c.bf16 %v322, %v322
    %v342 = vlaneseq
    %v343 = vshrl.u32 %v342, 7
    %v344 = vsub.s32 0, %v343
    %v345 = vrot.slane %v339, %v344
    %v363 = vunpack.c.l.b16 %v323
    %v364 = vunpack.c.l.b16 %v324
    %v365 = vunpack.c.l.b16 %v325
    %v366 = vunpack.c.l.b16 %v326
    %v367 = vunpack.c.l.b16 %v327
    %v368 = vunpack.c.l.b16 %v328
    %v369 = vunpack.c.l.b16 %v329
    %v370 = vunpack.c.l.b16 %v330
    %v371 = vunpack.c.l.b16 %v331
    %v372 = vunpack.c.l.b16 %v332
    %v373 = vunpack.c.l.b16 %v333
    %v374 = vunpack.c.l.b16 %v334
    %v375 = vunpack.c.l.b16 %v335
    %v376 = vunpack.c.l.b16 %v336
    %v377 = vunpack.c.l.b16 %v337
    %v378 = vunpack.c.l.b16 %v338
    %v379 = vpack.c.b16 %v364, %v363
    %v380 = vpack.c.b16 %v366, %v365
    %v381 = vpack.c.b16 %v368, %v367
    %v382 = vpack.c.b16 %v370, %v369
    %v383 = vpack.c.b16 %v372, %v371
    %v384 = vpack.c.b16 %v374, %v373
    %v385 = vpack.c.b16 %v376, %v375
    %v386 = vpack.c.b16 %v378, %v377
    %395 = vmatprep.subr.bf16.mxu0 0
    %396 = vmatpush1.bf16.msra.mxu0 %v386
    %397 = vmatprep.subr.bf16.mxu0 0
    %398 = vmatpush1.bf16.msra.mxu0 %v385
    %399 = vmatprep.subr.bf16.mxu0 0
    %400 = vmatpush1.bf16.msra.mxu0 %v384
    %401 = vmatprep.subr.bf16.mxu0 0
    %402 = vmatpush1.bf16.msra.mxu0 %v383
    %403 = vmatprep.subr.bf16.mxu0 0
    %404 = vmatpush1.bf16.msra.mxu0 %v382
    %405 = vmatprep.subr.bf16.mxu0 0
    %406 = vmatpush1.bf16.msra.mxu0 %v381
    %407 = vmatprep.subr.bf16.mxu0 0
    %408 = vmatpush1.bf16.msra.mxu0 %v380
    %409 = vmatprep.subr.bf16.mxu0 0
    %410 = vmatpush1.bf16.msra.mxu0 %v379
    %411 = vmatprep.subr.bf16.mxu0 0
    %412 = vmatpush2.bf16.msra.mxu0 0
    %413 = vmatprep.subr.bf16.mxu0 0
    %414 = vmatpush2.bf16.msra.mxu0 0
    %415 = vmatprep.subr.bf16.mxu0 0
    %416 = vmatpush2.bf16.msra.mxu0 0
    %417 = vmatprep.subr.bf16.mxu0 0
    %418 = vmatpush2.bf16.msra.mxu0 0
    %419 = vmatprep.subr.bf16.mxu0 0
    %420 = vmatpush2.bf16.msra.mxu0 0
    %421 = vmatprep.subr.bf16.mxu0 0
    %422 = vmatpush2.bf16.msra.mxu0 0
    %423 = vmatprep.subr.bf16.mxu0 0
    %424 = vmatpush2.bf16.msra.mxu0 0
    %425 = vmatprep.subr.bf16.mxu0 0
    %426 = vmatpush2.bf16.msra.mxu0 0
    %427 = vmatprep.mubr.bf16.mxu0 0
    %428 = vmatmul.mubr.bf16.gmra.mxu0 %v340
    %v429 = vpop.f32.mrf.mxu0
    %v430 = vadd.f32 %v345, %v429
    %v431 = vpop.f32.mrf.mxu0
    %v432 = vpop.f32.mrf.mxu0
    %v433 = vpop.f32.mrf.mxu0
    %434 = vdwg.mxu0
    %v435 = vmul.f32 %v430, 0.5
    %v436 = vtanh.pop %v435
    %v437 = vadd.f32 %v436, 1.0
    %v438 = vmul.f32 %v437, 0.5
    %v439 = vmul.f32 %v430, %v438
    %v440 = vld [vmem:[#allocation7] sm:$0xf]
    %v441 = vld [vmem:[#allocation7 + $0x4] sm:$0xf]
    %v442 = vld [vmem:[#allocation7 + $0x8] sm:$0xf]
    %v443 = vld [vmem:[#allocation7 + $0xc] sm:$0xf]
    %v444 = vld [vmem:[#allocation7 + $0x10] sm:$0xf]
    %v445 = vld [vmem:[#allocation7 + $0x14] sm:$0xf]
    %v446 = vld [vmem:[#allocation7 + $0x18] sm:$0xf]
    %v447 = vld [vmem:[#allocation7 + $0x1c] sm:$0xf]
    %v448 = vld [vmem:[#allocation7 + $0x20] sm:$0xf]
    %v449 = vld [vmem:[#allocation7 + $0x24] sm:$0xf]
    %v450 = vld [vmem:[#allocation7 + $0x28] sm:$0xf]
    %v451 = vld [vmem:[#allocation7 + $0x2c] sm:$0xf]
    %v452 = vld [vmem:[#allocation7 + $0x30] sm:$0xf]
    %v453 = vld [vmem:[#allocation7 + $0x34] sm:$0xf]
    %v454 = vld [vmem:[#allocation7 + $0x38] sm:$0xf]
    %v455 = vld [vmem:[#allocation7 + $0x3c] sm:$0xf]
    %v456 = vld [vmem:[%s8] sm:$0x1]
    %v457 = vpack.c.bf16 %v439, %v439
    %v459 = vlaneseq
    %v460 = vshrl.u32 %v459, 7
    %v461 = vsub.s32 0, %v460
    %v462 = vrot.slane %v456, %v461
    %v480 = vunpack.c.l.b16 %v440
    %v481 = vunpack.c.l.b16 %v441
    %v482 = vunpack.c.l.b16 %v442
    %v483 = vunpack.c.l.b16 %v443
    %v484 = vunpack.c.l.b16 %v444
    %v485 = vunpack.c.l.b16 %v445
    %v486 = vunpack.c.l.b16 %v446
    %v487 = vunpack.c.l.b16 %v447
    %v488 = vunpack.c.l.b16 %v448
    %v489 = vunpack.c.l.b16 %v449
    %v490 = vunpack.c.l.b16 %v450
    %v491 = vunpack.c.l.b16 %v451
    %v492 = vunpack.c.l.b16 %v452
    %v493 = vunpack.c.l.b16 %v453
    %v494 = vunpack.c.l.b16 %v454
    %v495 = vunpack.c.l.b16 %v455
    %v496 = vpack.c.b16 %v481, %v480
    %v497 = vpack.c.b16 %v483, %v482
    %v498 = vpack.c.b16 %v485, %v484
    %v499 = vpack.c.b16 %v487, %v486
    %v500 = vpack.c.b16 %v489, %v488
    %v501 = vpack.c.b16 %v491, %v490
    %v502 = vpack.c.b16 %v493, %v492
    %v503 = vpack.c.b16 %v495, %v494
    %512 = vmatprep.subr.bf16.mxu0 0
    %513 = vmatpush1.bf16.msra.mxu0 %v503
    %514 = vmatprep.subr.bf16.mxu0 0
    %515 = vmatpush1.bf16.msra.mxu0 %v502
    %516 = vmatprep.subr.bf16.mxu0 0
    %517 = vmatpush1.bf16.msra.mxu0 %v501
    %518 = vmatprep.subr.bf16.mxu0 0
    %519 = vmatpush1.bf16.msra.mxu0 %v500
    %520 = vmatprep.subr.bf16.mxu0 0
    %521 = vmatpush1.bf16.msra.mxu0 %v499
    %522 = vmatprep.subr.bf16.mxu0 0
    %523 = vmatpush1.bf16.msra.mxu0 %v498
    %524 = vmatprep.subr.bf16.mxu0 0
    %525 = vmatpush1.bf16.msra.mxu0 %v497
    %526 = vmatprep.subr.bf16.mxu0 0
    %527 = vmatpush1.bf16.msra.mxu0 %v496
    %528 = vmatprep.subr.bf16.mxu0 0
    %529 = vmatpush2.bf16.msra.mxu0 0
    %530 = vmatprep.subr.bf16.mxu0 0
    %531 = vmatpush2.bf16.msra.mxu0 0
    %532 = vmatprep.subr.bf16.mxu0 0
    %533 = vmatpush2.bf16.msra.mxu0 0
    %534 = vmatprep.subr.bf16.mxu0 0
    %535 = vmatpush2.bf16.msra.mxu0 0
    %536 = vmatprep.subr.bf16.mxu0 0
    %537 = vmatpush2.bf16.msra.mxu0 0
    %538 = vmatprep.subr.bf16.mxu0 0
    %539 = vmatpush2.bf16.msra.mxu0 0
    %540 = vmatprep.subr.bf16.mxu0 0
    %541 = vmatpush2.bf16.msra.mxu0 0
    %542 = vmatprep.subr.bf16.mxu0 0
    %543 = vmatpush2.bf16.msra.mxu0 0
    %544 = vmatprep.mubr.bf16.mxu0 0
    %545 = vmatmul.mubr.bf16.gmra.mxu0 %v457
    %v546 = vpop.f32.mrf.mxu0
    %v547 = vadd.f32 %v462, %v546
    %v548 = vpop.f32.mrf.mxu0
    %v549 = vpop.f32.mrf.mxu0
    %v550 = vpop.f32.mrf.mxu0
    %551 = vdwg.mxu0
    %552 = vst [vmem:[%s9] sm:$0xff] %v547
    // Predicated region
    $region54: #{ann_forward.1} parent=1 // pred_check
      _
    $region55: #{ann_forward.1} parent=1 // pred_check_branch
      %554 = sbr.rel (0) target = $region57
    $region56: #{ann_forward.1} parent=1 // pred_region
      _
    $region57: #{ann_forward.1} parent=1 // pred_fallthru
      _
    // Predicated region
    $region58: #{ann_forward.1} parent=1 // pred_check
      _
    $region59: #{ann_forward.1} parent=1 // pred_check_branch
      %556 = sbr.rel (0) target = $region61
    $region60: #{ann_forward.1} parent=1 // pred_region
      _
    $region61: #{ann_forward.1} parent=1 // pred_fallthru
      _
    %557 = vsyncpa [#allocation3], 1
    %558 = vsyncpa [#allocation5], 1
    %559 = vsyncpa [#allocation8], 1

</llo_original>
